<compile_context>
chip_gen: v7x
topology: tpu7x:2x2x1
jax: 0.10.0
libtpu: 0.0.40
codegen_flags: <defaults>
</compile_context>

<pallas_src>
from functools import partial

import jax
import jax.numpy as jnp
from jax.experimental import pallas as pl
from jax.experimental.pallas import tpu as pltpu

EPS = 1e-5
_CONV_VMEM_LIMIT = 32 * 1024 * 1024
_FC_VMEM_LIMIT = 32 * 1024 * 1024


# --------------------------------------------------------------------------
# In-kernel helpers
# --------------------------------------------------------------------------
def _lane_mask(tile_n, n_total):
    """(1, tile_n) bool mask: True where the global point index is < N."""
    t = pl.program_id(1)
    lane = jax.lax.broadcasted_iota(jnp.int32, (1, tile_n), 1)
    return (t * tile_n + lane) < n_total


# --------------------------------------------------------------------------
# Conv-stage kernels (grid = (B, num_point_tiles), layout = (C, TILE_N))
# Stats outputs are VMEM-resident accumulators across the point-tile axis.
# --------------------------------------------------------------------------
def _conv_stats1_kernel(n, tile_n, x_ref, w1t_ref, sum_ref, sumsq_ref):
    """conv1 on a point tile; accumulate bn1 partial sums."""
    @pl.when(pl.program_id(1) == 0)
    def _():
        sum_ref[...] = jnp.zeros_like(sum_ref)
        sumsq_ref[...] = jnp.zeros_like(sumsq_ref)

    mask = _lane_mask(tile_n, n)
    h1 = jnp.dot(w1t_ref[...], x_ref[...],
                 preferred_element_type=jnp.float32)          # (64, T)
    hm = jnp.where(mask, h1, 0.0)
    sum_ref[...] += jnp.sum(hm, axis=1, keepdims=True)         # (64, 1)
    sumsq_ref[...] += jnp.sum(hm * hm, axis=1, keepdims=True)


def _conv_stats2_kernel(n, tile_n, x_ref, w1t_ref, s1_ref, o1_ref, w2t_ref,
                        sum_ref, sumsq_ref):
    """conv1 -> folded bn1+relu -> conv2 (bf16 MXU); accumulate bn2 sums."""
    @pl.when(pl.program_id(1) == 0)
    def _():
        sum_ref[...] = jnp.zeros_like(sum_ref)
        sumsq_ref[...] = jnp.zeros_like(sumsq_ref)

    mask = _lane_mask(tile_n, n)
    h1 = jnp.dot(w1t_ref[...], x_ref[...],
                 preferred_element_type=jnp.float32)          # (64, T)
    y1 = jnp.maximum(h1 * s1_ref[...] + o1_ref[...], 0.0)     # folded bn1+relu
    h2 = jnp.dot(w2t_ref[...], y1.astype(jnp.bfloat16),
                 preferred_element_type=jnp.float32)          # (128, T)
    hm = jnp.where(mask, h2, 0.0)
    sum_ref[...] += jnp.sum(hm, axis=1, keepdims=True)
    sumsq_ref[...] += jnp.sum(hm * hm, axis=1, keepdims=True)


def _conv_stats3_kernel(n, tile_n, x_ref, w1t_ref, s1_ref, o1_ref, w2t_ref,
                        s2_ref, o2_ref, w3t_ref,
                        sum_ref, sumsq_ref, max_ref, min_ref):
    """conv1..conv3; accumulate bn3 sums + per-batch max/min of raw conv3."""
    @pl.when(pl.program_id(1) == 0)
    def _():
        sum_ref[...] = jnp.zeros_like(sum_ref)
        sumsq_ref[...] = jnp.zeros_like(sumsq_ref)
        max_ref[...] = jnp.full_like(max_ref, -jnp.inf)
        min_ref[...] = jnp.full_like(min_ref, jnp.inf)

    mask = _lane_mask(tile_n, n)
    h1 = jnp.dot(w1t_ref[...], x_ref[...],
                 preferred_element_type=jnp.float32)          # (64, T)
    y1 = jnp.maximum(h1 * s1_ref[...] + o1_ref[...], 0.0)
    h2 = jnp.dot(w2t_ref[...], y1.astype(jnp.bfloat16),
                 preferred_element_type=jnp.float32)          # (128, T)
    y2 = jnp.maximum(h2 * s2_ref[...] + o2_ref[...], 0.0)
    h3 = jnp.dot(w3t_ref[...], y2.astype(jnp.bfloat16),
                 preferred_element_type=jnp.float32)          # (1024, T)
    hm = jnp.where(mask, h3, 0.0)
    sum_ref[...] += jnp.sum(hm, axis=1, keepdims=True)         # (1024, 1)
    sumsq_ref[...] += jnp.sum(hm * hm, axis=1, keepdims=True)
    max_ref[...] = jnp.maximum(
        max_ref[...],
        jnp.max(jnp.where(mask, h3, -jnp.inf), axis=1, keepdims=True))
    min_ref[...] = jnp.minimum(
        min_ref[...],
        jnp.min(jnp.where(mask, h3, jnp.inf), axis=1, keepdims=True))


# --------------------------------------------------------------------------
# FC-stage kernel (tiny: everything (B, <=1024), single invocation, VMEM)
# --------------------------------------------------------------------------
def _fc_kernel(k, hmax_ref, hmin_ref, s3_ref, o3_ref,
               fw1_ref, g4_ref, be4_ref, fw2_ref, g5_ref, be5_ref,
               fw3_ref, fb3_ref, out_ref):
    s3 = s3_ref[...]                                          # (1, 1024)
    # bn3 + relu + max-pool over points, exactly: max over points of an affine
    # per-channel map is scale*max(h3) if scale>=0 else scale*min(h3).
    pre = jnp.where(s3 >= 0.0, hmax_ref[...], hmin_ref[...]) * s3 + o3_ref[...]
    pooled = jnp.maximum(pre, 0.0)                            # (B, 1024)

    def bn_relu(x, gamma, beta):
        # one-pass folded training-mode BatchNorm1d over the batch axis + relu
        nb = x.shape[0]
        mean = jnp.sum(x, axis=0, keepdims=True) / nb
        var = jnp.maximum(jnp.sum(x * x, axis=0, keepdims=True) / nb
                          - mean * mean, 0.0)
        scale = gamma * jax.lax.rsqrt(var + EPS)
        return jnp.maximum(x * scale + (beta - mean * scale), 0.0)

    f = jnp.dot(pooled.astype(jnp.bfloat16), fw1_ref[...],
                preferred_element_type=jnp.float32)           # (B, 512)
    f = bn_relu(f, g4_ref[...], be4_ref[...])
    f = jnp.dot(f, fw2_ref[...], preferred_element_type=jnp.float32)   # (B, 256)
    f = bn_relu(f, g5_ref[...], be5_ref[...])
    f = jnp.dot(f, fw3_ref[...], preferred_element_type=jnp.float32) + fb3_ref[...]

    # idmtx + x : flattened k x k identity (diagonal where idx % (k+1) == 0)
    idx = jax.lax.broadcasted_iota(jnp.int32, (1, k * k), 1)
    eye_flat = (idx % (k + 1) == 0).astype(jnp.float32)
    out_ref[...] = f + eye_flat


# --------------------------------------------------------------------------
# Wrappers
# --------------------------------------------------------------------------
def _choose_tile(n):
    for t in (1024, 512, 256, 128):
        if n % t == 0:
            return t
    if n >= 128:
        return 128
    return n


def _const_spec(a):
    # full-array block, constant block index -> fetched once, stays in VMEM
    return pl.BlockSpec(a.shape, lambda bi, ti, _nd=a.ndim: (0,) * _nd)


def _run_conv_pass(kernel_fn, data_in, aux, out_channels, num_outputs, tile_n):
    b, k, n = data_in.shape
    nt = pl.cdiv(n, tile_n)
    # Per-batch accumulators: (B, C, 1); resident in VMEM across the tile axis.
    stat_shape = jax.ShapeDtypeStruct((b, out_channels, 1), jnp.float32)
    stat_spec = pl.BlockSpec((None, out_channels, 1), lambda bi, ti: (bi, 0, 0))
    x_spec = pl.BlockSpec((None, k, tile_n), lambda bi, ti: (bi, 0, ti))
    return pl.pallas_call(
        partial(kernel_fn, n, tile_n),
        out_shape=tuple(stat_shape for _ in range(num_outputs)),
        grid_spec=pltpu.PrefetchScalarGridSpec(
            num_scalar_prefetch=0,
            grid=(b, nt),
            in_specs=[x_spec] + [_const_spec(a) for a in aux],
            out_specs=tuple(stat_spec for _ in range(num_outputs)),
        ),
        compiler_params=pltpu.CompilerParams(
            dimension_semantics=("parallel", "arbitrary"),
            vmem_limit_bytes=_CONV_VMEM_LIMIT,
        ),
    )(data_in, *aux)


def _bn_fold(psum, psumsq, gamma, beta, count):
    """Fold global batch stats into per-channel (scale, offset)."""
    s = jnp.sum(psum[..., 0], axis=0)                          # (C,)
    ss = jnp.sum(psumsq[..., 0], axis=0)
    mean = s / count
    var = jnp.maximum(ss / count - mean * mean, 0.0)           # biased, clamped
    scale = gamma * jax.lax.rsqrt(var + EPS)
    return scale, beta - mean * scale


def tnet_forward(data_in, params, k=3, tile_n=None):
    """data_in: (B, k, N) float32 (PyTorch Conv1d NCW layout). Returns (B, k, k)."""
    b, kk, n = data_in.shape
    assert kk == k
    if tile_n is None:
        tile_n = _choose_tile(n)
    count = float(b * n)

    w1t = params["w1t"]                              # (64, k)  f32 (tiny K)
    w2t = params["w2t"].astype(jnp.bfloat16)         # (128, 64)
    w3t = params["w3t"].astype(jnp.bfloat16)         # (1024, 128)

    # pass 1: bn1 statistics
    sum1, sumsq1 = _run_conv_pass(_conv_stats1_kernel, data_in, [w1t],
                                  64, 2, tile_n)
    s1, o1 = _bn_fold(sum1, sumsq1, params["g1"], params["be1"], count)

    # pass 2: bn2 statistics
    sum2, sumsq2 = _run_conv_pass(
        _conv_stats2_kernel, data_in,
        [w1t, s1[:, None], o1[:, None], w2t], 128, 2, tile_n)
    s2, o2 = _bn_fold(sum2, sumsq2, params["g2"], params["be2"], count)

    # pass 3: bn3 statistics + per-batch max/min of raw conv3 activation
    sum3, sumsq3, pmax, pmin = _run_conv_pass(
        _conv_stats3_kernel, data_in,
        [w1t, s1[:, None], o1[:, None], w2t, s2[:, None], o2[:, None], w3t],
        1024, 4, tile_n)
    s3, o3 = _bn_fold(sum3, sumsq3, params["g3"], params["be3"], count)
    hmax = pmax[..., 0]                               # (B, 1024)
    hmin = pmin[..., 0]                               # (B, 1024)

    # fc stage (tiny) in a single whole-in-VMEM kernel
    vmem = pl.BlockSpec(memory_space=pltpu.MemorySpace.VMEM)
    fc_inputs = [hmax, hmin, s3[None, :], o3[None, :],
                 params["fw1"].astype(jnp.bfloat16),
                 params["g4"][None, :], params["be4"][None, :],
                 params["fw2"],
                 params["g5"][None, :], params["be5"][None, :],
                 params["fw3"], params["fb3"][None, :]]
    out = pl.pallas_call(
        partial(_fc_kernel, k),
        out_shape=jax.ShapeDtypeStruct((b, k * k), jnp.float32),
        in_specs=[vmem] * len(fc_inputs),
        out_specs=vmem,
        compiler_params=pltpu.CompilerParams(vmem_limit_bytes=_FC_VMEM_LIMIT),
    )(*fc_inputs)
    return out.reshape(b, k, k)


# --------------------------------------------------------------------------
# Parameters
# --------------------------------------------------------------------------
def init_params(key, k=3):
    keys = iter(jax.random.split(key, 24))

    def nrm(shape, scale=0.05):
        return scale * jax.random.normal(next(keys), shape, dtype=jnp.float32)

    p = {}
    # conv weights stored pre-transposed as (Cout, Cin); kernel size 1
    p["w1t"] = nrm((64, k))
    p["w2t"] = nrm((128, 64))
    p["w3t"] = nrm((1024, 128))
    # fc weights as (Cin, Cout); only fc3 keeps its bias (no BN after it)
    p["fw1"] = nrm((1024, 512))
    p["fw2"] = nrm((512, 256))
    p["fw3"] = nrm((256, k * k))
    p["fb3"] = nrm((k * k,))
    # BatchNorm affine params. Conv/fc biases feeding a training-mode BN are
    # omitted: they cancel exactly after mean subtraction.
    for name, c in (("1", 64), ("2", 128), ("3", 1024), ("4", 512), ("5", 256)):
        p["g" + name] = 1.0 + nrm((c,), 0.01)
        p["be" + name] = nrm((c,), 0.01)
    return p


if __name__ == "__main__":
    key = jax.random.PRNGKey(0)
    k_pts, k_par = jax.random.split(key)

    B, K, N = 2, 3, 384                      # small demo shapes (NCW input)
    data_in = jax.random.normal(k_pts, (B, K, N), dtype=jnp.float32)
    params = init_params(k_par, k=K)

    out = tnet_forward(data_in, params, k=K, tile_n=128)   # 3 point-tiles/batch
    jax.block_until_ready(out)
    assert out.shape == (B, K, K)
    assert bool(jnp.all(jnp.isfinite(out)))
    print("KERNEL_OK")
</pallas_src>

<mosaic_0001>
module attributes {stable_mosaic.version = 11 : i64} {
  func.func @_conv_stats1_kernel(%arg0: i32, %arg1: i32, %arg2: memref<1x3x128xf32, #tpu.memory_space<vmem>>, %arg3: memref<64x3xf32, #tpu.memory_space<vmem>>, %arg4: memref<1x64x1xf32, #tpu.memory_space<vmem>>, %arg5: memref<1x64x1xf32, #tpu.memory_space<vmem>>) attributes {dimension_semantics = [#tpu.dimension_semantics<parallel>, #tpu.dimension_semantics<arbitrary>], iteration_bounds = array<i64: 2, 3>, scalar_prefetch = 0 : i64, scratch_operands = 0 : i64, tpu.core_type = #tpu.core_type<tc>, window_params = [{transform_indices = @transform_0, window_bounds = array<i64: 1, 3, 128>}, {pipeline_mode = #tpu.pipeline_mode<synchronous>, transform_indices = @transform_1, window_bounds = array<i64: 64, 3>}, {transform_indices = @transform_2, window_bounds = array<i64: 1, 64, 1>}, {transform_indices = @transform_3, window_bounds = array<i64: 1, 64, 1>}]} {
    %c0_i32 = arith.constant 0 : i32
    %0 = arith.cmpi eq, %arg1, %c0_i32 : i32
    %1 = arith.extui %0 : i1 to i32
    %c0_i32_0 = arith.constant 0 : i32
    %2 = arith.cmpi ne, %1, %c0_i32_0 : i32
    scf.if %2 {
      %cst_20 = arith.constant 0.000000e+00 : f32
      %34 = vector.broadcast %cst_20 : f32 to vector<64x1xf32>
      %c0_21 = arith.constant 0 : index
      %c0_22 = arith.constant 0 : index
      %c0_23 = arith.constant 0 : index
      %35 = vector.load %arg4[%c0_21, %c0_22, %c0_23] : memref<1x64x1xf32, #tpu.memory_space<vmem>>, vector<1x64x1xf32>
      %36 = vector.shape_cast %35 : vector<1x64x1xf32> to vector<64x1xf32>
      %37 = vector.shape_cast %34 : vector<64x1xf32> to vector<1x64x1xf32>
      tpu.vector_store %arg4[%c0_21, %c0_22, %c0_23], %37 {strides = array<i32>} : memref<1x64x1xf32, #tpu.memory_space<vmem>>, vector<1x64x1xf32>,
      %cst_24 = arith.constant 0.000000e+00 : f32
      %38 = vector.broadcast %cst_24 : f32 to vector<64x1xf32>
      %c0_25 = arith.constant 0 : index
      %c0_26 = arith.constant 0 : index
      %c0_27 = arith.constant 0 : index
      %39 = vector.load %arg5[%c0_25, %c0_26, %c0_27] : memref<1x64x1xf32, #tpu.memory_space<vmem>>, vector<1x64x1xf32>
      %40 = vector.shape_cast %39 : vector<1x64x1xf32> to vector<64x1xf32>
      %41 = vector.shape_cast %38 : vector<64x1xf32> to vector<1x64x1xf32>
      tpu.vector_store %arg5[%c0_25, %c0_26, %c0_27], %41 {strides = array<i32>} : memref<1x64x1xf32, #tpu.memory_space<vmem>>, vector<1x64x1xf32>,
    } else {
    }
    %3 = tpu.iota {dimensions = array<i32: 1>} : vector<1x128xi32>
    %c128_i32 = arith.constant 128 : i32
    %4 = arith.muli %arg1, %c128_i32 : i32
    %5 = vector.broadcast %4 : i32 to vector<1x128xi32>
    %6 = arith.addi %5, %3 : vector<1x128xi32>
    %c384_i32 = arith.constant 384 : i32
    %7 = vector.broadcast %c384_i32 : i32 to vector<1x128xi32>
    %8 = arith.cmpi slt, %6, %7 : vector<1x128xi32>
    %c0 = arith.constant 0 : index
    %c0_1 = arith.constant 0 : index
    %9 = vector.load %arg3[%c0, %c0_1] : memref<64x3xf32, #tpu.memory_space<vmem>>, vector<64x3xf32>
    %c0_2 = arith.constant 0 : index
    %c0_3 = arith.constant 0 : index
    %c0_4 = arith.constant 0 : index
    %10 = vector.load %arg2[%c0_2, %c0_3, %c0_4] : memref<1x3x128xf32, #tpu.memory_space<vmem>>, vector<1x3x128xf32>
    %11 = vector.shape_cast %10 : vector<1x3x128xf32> to vector<3x128xf32>
    %cst = arith.constant dense<0.000000e+00> : vector<64x128xf32>
    %12 = tpu.matmul %9, %11, %cst {dimension_numbers = #tpu.dot_dimension_numbers<[1], [0], [0], [1], [0, 0, 1, 1], [], []>} : vector<64x3xf32>, vector<3x128xf32>, vector<64x128xf32> -> vector<64x128xf32>
    %cst_5 = arith.constant 0.000000e+00 : f32
    %13 = vector.shape_cast %8 : vector<1x128xi1> to vector<1x128xi1>
    %14 = vector.broadcast %13 : vector<1x128xi1> to vector<64x128xi1>
    %15 = vector.broadcast %cst_5 : f32 to vector<64x128xf32>
    %16 = arith.select %14, %12, %15 : vector<64x128xi1>, vector<64x128xf32>
    %c0_6 = arith.constant 0 : index
    %c0_7 = arith.constant 0 : index
    %c0_8 = arith.constant 0 : index
    %17 = vector.load %arg4[%c0_6, %c0_7, %c0_8] : memref<1x64x1xf32, #tpu.memory_space<vmem>>, vector<1x64x1xf32>
    %18 = vector.shape_cast %17 : vector<1x64x1xf32> to vector<64x1xf32>
    %cst_9 = arith.constant dense<0.000000e+00> : vector<64xf32>
    %19 = vector.multi_reduction <add>, %16, %cst_9 [1] : vector<64x128xf32> to vector<64xf32>
    %20 = vector.shape_cast %19 : vector<64xf32> to vector<64x1xf32>
    %21 = arith.addf %18, %20 : vector<64x1xf32>
    %c0_10 = arith.constant 0 : index
    %c0_11 = arith.constant 0 : index
    %c0_12 = arith.constant 0 : index
    %22 = vector.load %arg4[%c0_10, %c0_11, %c0_12] : memref<1x64x1xf32, #tpu.memory_space<vmem>>, vector<1x64x1xf32>
    %23 = vector.shape_cast %22 : vector<1x64x1xf32> to vector<64x1xf32>
    %24 = vector.shape_cast %21 : vector<64x1xf32> to vector<1x64x1xf32>
    tpu.vector_store %arg4[%c0_10, %c0_11, %c0_12], %24 {strides = array<i32>} : memref<1x64x1xf32, #tpu.memory_space<vmem>>, vector<1x64x1xf32>,
    %c0_13 = arith.constant 0 : index
    %c0_14 = arith.constant 0 : index
    %c0_15 = arith.constant 0 : index
    %25 = vector.load %arg5[%c0_13, %c0_14, %c0_15] : memref<1x64x1xf32, #tpu.memory_space<vmem>>, vector<1x64x1xf32>
    %26 = vector.shape_cast %25 : vector<1x64x1xf32> to vector<64x1xf32>
    %27 = arith.mulf %16, %16 : vector<64x128xf32>
    %cst_16 = arith.constant dense<0.000000e+00> : vector<64xf32>
    %28 = vector.multi_reduction <add>, %27, %cst_16 [1] : vector<64x128xf32> to vector<64xf32>
    %29 = vector.shape_cast %28 : vector<64xf32> to vector<64x1xf32>
    %30 = arith.addf %26, %29 : vector<64x1xf32>
    %c0_17 = arith.constant 0 : index
    %c0_18 = arith.constant 0 : index
    %c0_19 = arith.constant 0 : index
    %31 = vector.load %arg5[%c0_17, %c0_18, %c0_19] : memref<1x64x1xf32, #tpu.memory_space<vmem>>, vector<1x64x1xf32>
    %32 = vector.shape_cast %31 : vector<1x64x1xf32> to vector<64x1xf32>
    %33 = vector.shape_cast %30 : vector<64x1xf32> to vector<1x64x1xf32>
    tpu.vector_store %arg5[%c0_17, %c0_18, %c0_19], %33 {strides = array<i32>} : memref<1x64x1xf32, #tpu.memory_space<vmem>>, vector<1x64x1xf32>,
    return
  }
  func.func @transform_0(%arg0: i32, %arg1: i32) -> (i32, i32, i32) {
    %c0_i32 = arith.constant 0 : i32
    %c0_i32_0 = arith.constant 0 : i32
    return %arg0, %c0_i32, %arg1 : i32, i32, i32
  }
  func.func @transform_1(%arg0: i32, %arg1: i32) -> (i32, i32) {
    %c0_i32 = arith.constant 0 : i32
    %c0_i32_0 = arith.constant 0 : i32
    %c0_i32_1 = arith.constant 0 : i32
    return %c0_i32, %c0_i32_0 : i32, i32
  }
  func.func @transform_2(%arg0: i32, %arg1: i32) -> (i32, i32, i32) {
    %c0_i32 = arith.constant 0 : i32
    %c0_i32_0 = arith.constant 0 : i32
    %c0_i32_1 = arith.constant 0 : i32
    return %arg0, %c0_i32, %c0_i32_0 : i32, i32, i32
  }
  func.func @transform_3(%arg0: i32, %arg1: i32) -> (i32, i32, i32) {
    %c0_i32 = arith.constant 0 : i32
    %c0_i32_0 = arith.constant 0 : i32
    %c0_i32_1 = arith.constant 0 : i32
    return %arg0, %c0_i32, %c0_i32_0 : i32, i32, i32
  }
}

</mosaic_0001>

<llo_original>
// kernel: tpu_custom_call.1
$region0: #{tpu_custom_call.1}
  #allocation0 [shape = 'u32[]', space=smem, size = 0x4, offset = 0x4, fixed_abs, tag = 'smem constant byte address 0x4 - core index']
  #allocation1 [shape = 'u32[144,128]{1,0:T(1,128)}', space=vmem, size = 0x12000, scoped, tag = 'internal scratch']
  %s0 = inlined_call_operand.vmem [shape: f32[2,3,384], index: 0, kind: input, shape index: {}]
  %s1 = inlined_call_operand.vmem [shape: f32[64,3], index: 1, kind: input, shape index: {}]
  %s2 = inlined_call_operand.vmem [shape: f32[2,64,1], index: 2, kind: output, shape index: {0}]
  %s3 = inlined_call_operand.vmem [shape: f32[2,64,1], index: 3, kind: output, shape index: {1}]
  %4 = xla_tuple %s2, %s3
  %s5 = sld [smem:[#allocation0]]
  $region53: #{tpu_custom_call.1} parent=0
    _
  %s7 = ssub.s32 1, %s5
  %s8 = scalar_select 0, %s7, %s5
  loop: start=0, step=1, limit=8
  $region2: #{tpu_custom_call.1} parent=0 // loop_pre_header
    _
  $region3: #{tpu_custom_call.1} parent=0 // loop_header
    %s10 = sphi 0, %s14
    %p11 = scmp.ge.s32.totalorder %s10, 8
    %s17 = sphi 0, %s29
    %s18 = sphi 0, %s25
    %s19 = sphi 0, %s17
    %s20 = sphi 0, %s18
    %s21 = sphi 0, %s19
    %s22 = sphi 0, %s20
    %s34 = sphi 0, %s36
    %s37 = sphi 0, %s34
    %s38 = sphi 0, %s37
    %s54 = sphi 0, %s38
    %s58 = sphi 0, %s58
    %s60 = sphi 0, %s58
    %s61 = sphi 0, %s60
    %s75 = sphi 0, %s61
    %s81 = sphi 0, %s83
    %s84 = sphi 0, %s81
    %s85 = sphi 0, %s84
    %s101 = sphi 0, %s85
    %s107 = sphi 0, %s109
    %s110 = sphi 0, %s107
    %s111 = sphi 0, %s110
    %s127 = sphi 0, %s111
  $region4: #{tpu_custom_call.1} parent=0 // loop_header_branch
    %13 = sbr.rel (%p11) target = $region8
  $region5: #{tpu_custom_call.1} parent=0 // loop_body
    %s15 = ssub.s32 %s10, 1
    %s16 = ssub.s32 %s10, 2
    %s23 = sadd.s32 1, %s18
    %p24 = scmp.ge.s32.totalorder %s23, 3
    %s25 = scalar_select %p24, 0, %s23
    %s26 = sadd.s32 1, %s17
    %s27 = scalar_select %p24, %s26, %s17
    %p28 = scmp.ge.s32.totalorder %s27, 2
    %s29 = scalar_select %p28, 0, %s27
    %s30 = ssub.s32 %s17, %s29
    %s31 = ssub.s32 %s18, %s25
    %s32 = sor.u32 %s30, %s31
    %p33 = scmp.eq.s32.totalorder %s32, 0
    %s35 = sadd.s32 %s34, 1
    %s36 = scalar_select %p33, %s34, %s35
    %p39 = pneg %p33
    %p40 = scmp.eq.s32.totalorder %s10, 5
    %p41 = por %p39, %p40
    %p42 = scmp.ne.s32.totalorder %s34, %s37
    %p43 = scmp.eq.s32.totalorder %s10, 0
    %p44 = por %p42, %p43
    %p45 = scmp.ne.s32.totalorder %s34, %s37
    %p46 = scmp.eq.s32.totalorder %s15, 5
    %p47 = por %p45, %p46
    %p48 = scmp.ne.s32.totalorder %s37, %s38
    %p49 = scmp.eq.s32.totalorder %s15, 0
    %p50 = por %p48, %p49
    %p51 = scmp.ne.s32.totalorder %s37, %s38
    %p52 = scmp.eq.s32.totalorder %s16, 5
    %p53 = por %p51, %p52
    %p55 = scmp.ne.s32.totalorder %s38, %s54
    %p56 = scmp.eq.s32.totalorder %s16, 0
    %p57 = por %p55, %p56
    %s59 = sadd.s32 %s58, 1
    %p62 = scmp.eq.s32.totalorder %s10, 5
    %p63 = scmp.ne.s32.totalorder %s58, %s60
    %p64 = scmp.eq.s32.totalorder %s10, 0
    %p65 = por %p63, %p64
    %p66 = scmp.ne.s32.totalorder %s58, %s60
    %p67 = scmp.eq.s32.totalorder %s15, 5
    %p68 = por %p66, %p67
    %p69 = scmp.ne.s32.totalorder %s60, %s61
    %p70 = scmp.eq.s32.totalorder %s15, 0
    %p71 = por %p69, %p70
    %p72 = scmp.ne.s32.totalorder %s60, %s61
    %p73 = scmp.eq.s32.totalorder %s16, 5
    %p74 = por %p72, %p73
    %p76 = scmp.ne.s32.totalorder %s61, %s75
    %p77 = scmp.eq.s32.totalorder %s16, 0
    %p78 = por %p76, %p77
    %s79 = ssub.s32 %s17, %s29
    %p80 = scmp.eq.s32.totalorder %s79, 0
    %s82 = sadd.s32 %s81, 1
    %s83 = scalar_select %p80, %s81, %s82
    %p86 = pneg %p80
    %p87 = scmp.eq.s32.totalorder %s10, 5
    %p88 = por %p86, %p87
    %p89 = scmp.ne.s32.totalorder %s81, %s84
    %p90 = scmp.eq.s32.totalorder %s10, 0
    %p91 = por %p89, %p90
    %p92 = scmp.ne.s32.totalorder %s81, %s84
    %p93 = scmp.eq.s32.totalorder %s15, 5
    %p94 = por %p92, %p93
    %p95 = scmp.ne.s32.totalorder %s84, %s85
    %p96 = scmp.eq.s32.totalorder %s15, 0
    %p97 = por %p95, %p96
    %p98 = scmp.ne.s32.totalorder %s84, %s85
    %p99 = scmp.eq.s32.totalorder %s16, 5
    %p100 = por %p98, %p99
    %p102 = scmp.ne.s32.totalorder %s85, %s101
    %p103 = scmp.eq.s32.totalorder %s16, 0
    %p104 = por %p102, %p103
    %s105 = ssub.s32 %s17, %s29
    %p106 = scmp.eq.s32.totalorder %s105, 0
    %s108 = sadd.s32 %s107, 1
    %s109 = scalar_select %p106, %s107, %s108
    %p112 = pneg %p106
    %p113 = scmp.eq.s32.totalorder %s10, 5
    %p114 = por %p112, %p113
    %p115 = scmp.ne.s32.totalorder %s107, %s110
    %p116 = scmp.eq.s32.totalorder %s10, 0
    %p117 = por %p115, %p116
    %p118 = scmp.ne.s32.totalorder %s107, %s110
    %p119 = scmp.eq.s32.totalorder %s15, 5
    %p120 = por %p118, %p119
    %p121 = scmp.ne.s32.totalorder %s110, %s111
    %p122 = scmp.eq.s32.totalorder %s15, 0
    %p123 = por %p121, %p122
    %p124 = scmp.ne.s32.totalorder %s110, %s111
    %p125 = scmp.eq.s32.totalorder %s16, 5
    %p126 = por %p124, %p125
    %p128 = scmp.ne.s32.totalorder %s111, %s127
    %p129 = scmp.eq.s32.totalorder %s16, 0
    %p130 = por %p128, %p129
    %p131 = scmp.le.s32.totalorder 1, %s10
    %p132 = scmp.lt.s32.totalorder %s10, 7
    %p133 = pnand %p131, %p132
    %p134 = pneg %p133
    // Predicated region
    $region9: #{tpu_custom_call.1} parent=5 // pred_check
      _
    $region10: #{tpu_custom_call.1} parent=5 // pred_check_branch
      %136 = sbr.rel (%p133) target = $region12
    $region11: #{tpu_custom_call.1} parent=5 // pred_region
      %s137 = ssub.s32 %s10, 1
      // Predicated region
      $region13: #{tpu_custom_call.1} parent=11 // pred_check
        %p138 = pneg %p71
      $region14: #{tpu_custom_call.1} parent=11 // pred_check_branch
        %140 = sbr.rel (%p138) target = $region16
      $region15: #{tpu_custom_call.1} parent=11 // pred_region
        _
      $region16: #{tpu_custom_call.1} parent=11 // pred_fallthru
        _
    $region12: #{tpu_custom_call.1} parent=5 // pred_fallthru
      _
    %p141 = scmp.lt.s32.totalorder %s10, 6
    // Predicated region
    $region17: #{tpu_custom_call.1} parent=5 // pred_check
      %p142 = pneg %p141
    $region18: #{tpu_custom_call.1} parent=5 // pred_check_branch
      %144 = sbr.rel (%p142) target = $region20
    $region19: #{tpu_custom_call.1} parent=5 // pred_region
      // Predicated region
      $region21: #{tpu_custom_call.1} parent=19 // pred_check
        %p145 = pneg %p44
      $region22: #{tpu_custom_call.1} parent=19 // pred_check_branch
        %147 = sbr.rel (%p145) target = $region24
      $region23: #{tpu_custom_call.1} parent=19 // pred_region
        %p148 = scmp.lt.s32.totalorder %s17, 1
        %s149 = scalar_select %p148, %s17, 1
        %p150 = scmp.lt.s32.totalorder %s18, 2
        %s151 = scalar_select %p150, %s18, 2
        %s152 = smul.addr %s149, 3
        %s153 = sadd.s32 %s151, %s152
        %s154 = smul.addr %s153, 4
        %s155 = scalar_lea.vmem %s0, %s154
      $region24: #{tpu_custom_call.1} parent=19 // pred_fallthru
        _
    $region20: #{tpu_custom_call.1} parent=5 // pred_fallthru
      _
    %p156 = scmp.le.s32.totalorder 1, %s10
    %p157 = scmp.lt.s32.totalorder %s10, 7
    %p158 = pnand %p156, %p157
    %p159 = pneg %p158
    // Predicated region
    $region25: #{tpu_custom_call.1} parent=5 // pred_check
      _
    $region26: #{tpu_custom_call.1} parent=5 // pred_check_branch
      %161 = sbr.rel (%p158) target = $region28
    $region27: #{tpu_custom_call.1} parent=5 // pred_region
      %s162 = ssub.s32 %s10, 1
      %p163 = scmp.lt.s32.totalorder %s19, 1
      %s164 = scalar_select %p163, %s19, 1
      %p165 = scmp.lt.s32.totalorder %s20, 2
      %s166 = scalar_select %p165, %s20, 2
      %s167 = smul.addr %s164, 3
      %s168 = sadd.s32 %s166, %s167
      %s169 = smul.addr %s168, 4
      %s170 = scalar_lea.vmem %s0, %s169
      %p171 = pneg %p50
      %p172 = pneg %p47
      %p173 = pneg %p71
      %p174 = pneg %p68
      %p175 = pneg %p97
      %p176 = pneg %p94
      %p177 = scmp.lt.s32.totalorder %s19, 1
      %s178 = scalar_select %p177, %s19, 1
      %s179 = smul.addr %s178, 8
      %s180 = smul.addr %s179, 8
      %s181 = scalar_lea.vmem %s2, %s180
      %p182 = pneg %p123
      %p183 = pneg %p120
      %p184 = scmp.lt.s32.totalorder %s19, 1
      %s185 = scalar_select %p184, %s19, 1
      %s186 = smul.addr %s185, 8
      %s187 = smul.addr %s186, 8
      %s188 = scalar_lea.vmem %s3, %s187
      %p189 = scmp.lt.s32.totalorder %s19, 1
      %s190 = scalar_select %p189, %s19, 1
      %p191 = scmp.lt.s32.totalorder %s20, 2
      %s192 = scalar_select %p191, %s20, 2
      %s193 = smul.addr %s190, 3
      %s194 = sadd.s32 %s192, %s193
      %s195 = smul.addr %s194, 4
      %s196 = scalar_lea.vmem %s0, %s195
      %p197 = scmp.lt.s32.totalorder %s19, 1
      %s198 = scalar_select %p197, %s19, 1
      %s199 = smul.addr %s198, 8
      %s200 = smul.addr %s199, 8
      %s201 = scalar_lea.vmem %s2, %s200
      %p202 = scmp.lt.s32.totalorder %s19, 1
      %s203 = scalar_select %p202, %s19, 1
      %s204 = smul.addr %s203, 8
      %s205 = smul.addr %s204, 8
      %s206 = scalar_lea.vmem %s3, %s205
      %p207 = scmp.eq.s32.totalorder %s20, 0
      // Predicated region
      $region29: #{tpu_custom_call.1} parent=27 // pred_check
        %p208 = pneg %p207
      $region30: #{tpu_custom_call.1} parent=27 // pred_check_branch
        %210 = sbr.rel (%p208) target = $region32
      $region31: #{tpu_custom_call.1} parent=27 // pred_region
        %vm211 = vcmask 7168
        %212 = vst.msk [vmem:[%s201] sm:$0xff] %vm211, 0.0
        %213 = vst.msk [vmem:[%s201 + $0x8] sm:$0xff] %vm211, 0.0
        %214 = vst.msk [vmem:[%s201 + $0x10] sm:$0xff] %vm211, 0.0
        %215 = vst.msk [vmem:[%s201 + $0x18] sm:$0xff] %vm211, 0.0
        %216 = vst.msk [vmem:[%s201 + $0x20] sm:$0xff] %vm211, 0.0
        %217 = vst.msk [vmem:[%s201 + $0x28] sm:$0xff] %vm211, 0.0
        %218 = vst.msk [vmem:[%s201 + $0x30] sm:$0xff] %vm211, 0.0
        %219 = vst.msk [vmem:[%s201 + $0x38] sm:$0xff] %vm211, 0.0
        %220 = vst.msk [vmem:[%s206] sm:$0xff] %vm211, 0.0
        %221 = vst.msk [vmem:[%s206 + $0x8] sm:$0xff] %vm211, 0.0
        %222 = vst.msk [vmem:[%s206 + $0x10] sm:$0xff] %vm211, 0.0
        %223 = vst.msk [vmem:[%s206 + $0x18] sm:$0xff] %vm211, 0.0
        %224 = vst.msk [vmem:[%s206 + $0x20] sm:$0xff] %vm211, 0.0
        %225 = vst.msk [vmem:[%s206 + $0x28] sm:$0xff] %vm211, 0.0
        %226 = vst.msk [vmem:[%s206 + $0x30] sm:$0xff] %vm211, 0.0
        %227 = vst.msk [vmem:[%s206 + $0x38] sm:$0xff] %vm211, 0.0
      $region32: #{tpu_custom_call.1} parent=27 // pred_fallthru
        _
      %v228 = vlaneseq
      %v229 = vand.u32 %v228, 127
      %s230 = smul.u32 %s20, 128
      %v231 = vstv %s230
      %v232 = vadd.s32 %v231, %v229
      %vm233 = vcmp.lt.s32.totalorder %v232, 384
      %v234 = vld [vmem:[%s1] sm:$0xff]
      %v235 = vld [vmem:[%s1 + $0x8] sm:$0xff]
      %v236 = vld [vmem:[%s1 + $0x10] sm:$0xff]
      %v237 = vld [vmem:[%s1 + $0x18] sm:$0xff]
      %v238 = vld [vmem:[%s1 + $0x20] sm:$0xff]
      %v239 = vld [vmem:[%s1 + $0x28] sm:$0xff]
      %v240 = vld [vmem:[%s1 + $0x30] sm:$0xff]
      %v241 = vld [vmem:[%s1 + $0x38] sm:$0xff]
      %v242 = vld [vmem:[%s196] sm:$0x7]
      %vm243 = vcmask 23552
      %v245 = vsel %vm243, %v234, 0
      %v248 = vsel %vm243, %v235, 0
      %v251 = vsel %vm243, %v236, 0
      %v254 = vsel %vm243, %v237, 0
      %v257 = vsel %vm243, %v238, 0
      %v260 = vsel %vm243, %v239, 0
      %v263 = vsel %vm243, %v240, 0
      %v266 = vsel %vm243, %v241, 0
      %vm268 = vcmask 1042432
      %v270 = vsel %vm268, %v242, 0
      %272 = vmatprep.subr.mxu0 0.0
      %273 = vmatpush1.msra.mxu0 %v270
      %274 = vmatprep.subr.mxu0 0.0
      %275 = vmatpush1.msra.mxu0 0.0
      %276 = vmatprep.subr.mxu0 0.0
      %277 = vmatpush1.msra.mxu0 0.0
      %278 = vmatprep.subr.mxu0 0.0
      %279 = vmatpush1.msra.mxu0 0.0
      %280 = vmatprep.subr.mxu0 0.0
      %281 = vmatpush1.msra.mxu0 0.0
      %282 = vmatprep.subr.mxu0 0.0
      %283 = vmatpush1.msra.mxu0 0.0
      %284 = vmatprep.subr.mxu0 0.0
      %285 = vmatpush1.msra.mxu0 0.0
      %286 = vmatprep.subr.mxu0 0.0
      %287 = vmatpush1.msra.mxu0 0.0
      %288 = vmatprep.subr.mxu0 0.0
      %289 = vmatpush1.msra.mxu0 0.0
      %290 = vmatprep.subr.mxu0 0.0
      %291 = vmatpush1.msra.mxu0 0.0
      %292 = vmatprep.subr.mxu0 0.0
      %293 = vmatpush1.msra.mxu0 0.0
      %294 = vmatprep.subr.mxu0 0.0
      %295 = vmatpush1.msra.mxu0 0.0
      %296 = vmatprep.subr.mxu0 0.0
      %297 = vmatpush1.msra.mxu0 0.0
      %298 = vmatprep.subr.mxu0 0.0
      %299 = vmatpush1.msra.mxu0 0.0
      %300 = vmatprep.subr.mxu0 0.0
      %301 = vmatpush1.msra.mxu0 0.0
      %302 = vmatprep.subr.mxu0 0.0
      %303 = vmatpush1.msra.mxu0 0.0
      %304 = vmatprep.subr.mxu0 0.0
      %305 = vmatpush1.msra.mxu0 0.0
      %306 = vmatprep.subr.mxu0 0.0
      %307 = vmatpush1.msra.mxu0 0.0
      %308 = vmatprep.subr.mxu0 0.0
      %309 = vmatpush1.msra.mxu0 0.0
      %310 = vmatprep.subr.mxu0 0.0
      %311 = vmatpush1.msra.mxu0 0.0
      %312 = vmatprep.subr.mxu0 0.0
      %313 = vmatpush1.msra.mxu0 0.0
      %314 = vmatprep.subr.mxu0 0.0
      %315 = vmatpush1.msra.mxu0 0.0
      %316 = vmatprep.subr.mxu0 0.0
      %317 = vmatpush1.msra.mxu0 0.0
      %318 = vmatprep.subr.mxu0 0.0
      %319 = vmatpush1.msra.mxu0 0.0
      %320 = vmatprep.subr.mxu0 0.0
      %321 = vmatpush1.msra.mxu0 0.0
      %322 = vmatprep.subr.mxu0 0.0
      %323 = vmatpush1.msra.mxu0 0.0
      %324 = vmatprep.subr.mxu0 0.0
      %325 = vmatpush1.msra.mxu0 0.0
      %326 = vmatprep.subr.mxu0 0.0
      %327 = vmatpush1.msra.mxu0 0.0
      %328 = vmatprep.subr.mxu0 0.0
      %329 = vmatpush1.msra.mxu0 0.0
      %330 = vmatprep.subr.mxu0 0.0
      %331 = vmatpush1.msra.mxu0 0.0
      %332 = vmatprep.subr.mxu0 0.0
      %333 = vmatpush1.msra.mxu0 0.0
      %334 = vmatprep.subr.mxu0 0.0
      %335 = vmatpush1.msra.mxu0 0.0
      %336 = vmatprep.mubr.f32.mxu0 0.0
      %337 = vmatmul.mubr.f32.gmra.mrb[0].mxu0 %v245
      %v338 = vpop.f32.mrb[0].mxu0
      %v339 = vadd.f32 0.0, %v338
      %v340 = vpop.f32.mrb[0].mxu0
      %341 = vmatprep.mubr.f32.mxu0 0.0
      %342 = vmatmul.mubr.f32.gmra.mrb[0].mxu0 %v248
      %v343 = vpop.f32.mrb[0].mxu0
      %v344 = vadd.f32 0.0, %v343
      %v345 = vpop.f32.mrb[0].mxu0
      %346 = vmatprep.mubr.f32.mxu0 0.0
      %347 = vmatmul.mubr.f32.gmra.mrb[0].mxu0 %v251
      %v348 = vpop.f32.mrb[0].mxu0
      %v349 = vadd.f32 0.0, %v348
      %v350 = vpop.f32.mrb[0].mxu0
      %351 = vmatprep.mubr.f32.mxu0 0.0
      %352 = vmatmul.mubr.f32.gmra.mrb[0].mxu0 %v254
      %v353 = vpop.f32.mrb[0].mxu0
      %v354 = vadd.f32 0.0, %v353
      %v355 = vpop.f32.mrb[0].mxu0
      %356 = vmatprep.mubr.f32.mxu0 0.0
      %357 = vmatmul.mubr.f32.gmra.mrb[0].mxu0 %v257
      %v358 = vpop.f32.mrb[0].mxu0
      %v359 = vadd.f32 0.0, %v358
      %v360 = vpop.f32.mrb[0].mxu0
      %361 = vmatprep.mubr.f32.mxu0 0.0
      %362 = vmatmul.mubr.f32.gmra.mrb[0].mxu0 %v260
      %v363 = vpop.f32.mrb[0].mxu0
      %v364 = vadd.f32 0.0, %v363
      %v365 = vpop.f32.mrb[0].mxu0
      %366 = vmatprep.mubr.f32.mxu0 0.0
      %367 = vmatmul.mubr.f32.gmra.mrb[0].mxu0 %v263
      %v368 = vpop.f32.mrb[0].mxu0
      %v369 = vadd.f32 0.0, %v368
      %v370 = vpop.f32.mrb[0].mxu0
      %371 = vmatprep.mubr.f32.mxu0 0.0
      %372 = vmatmul.mubr.f32.gmra.mrb[0].mxu0 %v266
      %v373 = vpop.f32.mrb[0].mxu0
      %v374 = vadd.f32 0.0, %v373
      %v375 = vpop.f32.mrb[0].mxu0
      %376 = vdwg.mxu0
      %v377 = vsel %vm233, 1, 0
      %vm378 = vcmp.eq.s32.totalorder %v377, 1
      %v379 = vsel %vm378, %v339, 0.0
      %v380 = vsel %vm378, %v344, 0.0
      %v381 = vsel %vm378, %v349, 0.0
      %v382 = vsel %vm378, %v354, 0.0
      %v383 = vsel %vm378, %v359, 0.0
      %v384 = vsel %vm378, %v364, 0.0
      %v385 = vsel %vm378, %v369, 0.0
      %v386 = vsel %vm378, %v374, 0.0
      %v387 = vld [vmem:[%s201] sm:$0xff]
      %v388 = vld [vmem:[%s201 + $0x8] sm:$0xff]
      %v389 = vld [vmem:[%s201 + $0x10] sm:$0xff]
      %v390 = vld [vmem:[%s201 + $0x18] sm:$0xff]
      %v391 = vld [vmem:[%s201 + $0x20] sm:$0xff]
      %v392 = vld [vmem:[%s201 + $0x28] sm:$0xff]
      %v393 = vld [vmem:[%s201 + $0x30] sm:$0xff]
      %v394 = vld [vmem:[%s201 + $0x38] sm:$0xff]
      %395 = vadd.xlane.f32.xlu0 %v379
      %v396 = vpop.xlane.xlu0 %395
      %397 = vadd.xlane.f32.xlu0 %v380
      %v398 = vpop.xlane.xlu0 %397
      %399 = vadd.xlane.f32.xlu0 %v381
      %v400 = vpop.xlane.xlu0 %399
      %401 = vadd.xlane.f32.xlu0 %v382
      %v402 = vpop.xlane.xlu0 %401
      %403 = vadd.xlane.f32.xlu0 %v383
      %v404 = vpop.xlane.xlu0 %403
      %405 = vadd.xlane.f32.xlu0 %v384
      %v406 = vpop.xlane.xlu0 %405
      %407 = vadd.xlane.f32.xlu0 %v385
      %v408 = vpop.xlane.xlu0 %407
      %409 = vadd.xlane.f32.xlu0 %v386
      %v410 = vpop.xlane.xlu0 %409
      %v411 = vadd.f32 %v387, %v396
      %v412 = vadd.f32 %v388, %v398
      %v413 = vadd.f32 %v389, %v400
      %v414 = vadd.f32 %v390, %v402
      %v415 = vadd.f32 %v391, %v404
      %v416 = vadd.f32 %v392, %v406
      %v417 = vadd.f32 %v393, %v408
      %v418 = vadd.f32 %v394, %v410
      %vm419 = vcmask 7168
      %420 = vst.msk [vmem:[%s201] sm:$0xff] %vm419, %v411
      %421 = vst.msk [vmem:[%s201 + $0x8] sm:$0xff] %vm419, %v412
      %422 = vst.msk [vmem:[%s201 + $0x10] sm:$0xff] %vm419, %v413
      %423 = vst.msk [vmem:[%s201 + $0x18] sm:$0xff] %vm419, %v414
      %424 = vst.msk [vmem:[%s201 + $0x20] sm:$0xff] %vm419, %v415
      %425 = vst.msk [vmem:[%s201 + $0x28] sm:$0xff] %vm419, %v416
      %426 = vst.msk [vmem:[%s201 + $0x30] sm:$0xff] %vm419, %v417
      %427 = vst.msk [vmem:[%s201 + $0x38] sm:$0xff] %vm419, %v418
      %v428 = vld [vmem:[%s206] sm:$0xff]
      %v429 = vld [vmem:[%s206 + $0x8] sm:$0xff]
      %v430 = vld [vmem:[%s206 + $0x10] sm:$0xff]
      %v431 = vld [vmem:[%s206 + $0x18] sm:$0xff]
      %v432 = vld [vmem:[%s206 + $0x20] sm:$0xff]
      %v433 = vld [vmem:[%s206 + $0x28] sm:$0xff]
      %v434 = vld [vmem:[%s206 + $0x30] sm:$0xff]
      %v435 = vld [vmem:[%s206 + $0x38] sm:$0xff]
      %v436 = vmul.f32 %v379, %v379
      %v437 = vmul.f32 %v380, %v380
      %v438 = vmul.f32 %v381, %v381
      %v439 = vmul.f32 %v382, %v382
      %v440 = vmul.f32 %v383, %v383
      %v441 = vmul.f32 %v384, %v384
      %v442 = vmul.f32 %v385, %v385
      %v443 = vmul.f32 %v386, %v386
      %444 = vadd.xlane.f32.xlu0 %v436
      %v445 = vpop.xlane.xlu0 %444
      %446 = vadd.xlane.f32.xlu0 %v437
      %v447 = vpop.xlane.xlu0 %446
      %448 = vadd.xlane.f32.xlu0 %v438
      %v449 = vpop.xlane.xlu0 %448
      %450 = vadd.xlane.f32.xlu0 %v439
      %v451 = vpop.xlane.xlu0 %450
      %452 = vadd.xlane.f32.xlu0 %v440
      %v453 = vpop.xlane.xlu0 %452
      %454 = vadd.xlane.f32.xlu0 %v441
      %v455 = vpop.xlane.xlu0 %454
      %456 = vadd.xlane.f32.xlu0 %v442
      %v457 = vpop.xlane.xlu0 %456
      %458 = vadd.xlane.f32.xlu0 %v443
      %v459 = vpop.xlane.xlu0 %458
      %v460 = vadd.f32 %v428, %v445
      %v461 = vadd.f32 %v429, %v447
      %v462 = vadd.f32 %v430, %v449
      %v463 = vadd.f32 %v431, %v451
      %v464 = vadd.f32 %v432, %v453
      %v465 = vadd.f32 %v433, %v455
      %v466 = vadd.f32 %v434, %v457
      %v467 = vadd.f32 %v435, %v459
      %468 = vst.msk [vmem:[%s206] sm:$0xff] %vm419, %v460
      %469 = vst.msk [vmem:[%s206 + $0x8] sm:$0xff] %vm419, %v461
      %470 = vst.msk [vmem:[%s206 + $0x10] sm:$0xff] %vm419, %v462
      %471 = vst.msk [vmem:[%s206 + $0x18] sm:$0xff] %vm419, %v463
      %472 = vst.msk [vmem:[%s206 + $0x20] sm:$0xff] %vm419, %v464
      %473 = vst.msk [vmem:[%s206 + $0x28] sm:$0xff] %vm419, %v465
      %474 = vst.msk [vmem:[%s206 + $0x30] sm:$0xff] %vm419, %v466
      %475 = vst.msk [vmem:[%s206 + $0x38] sm:$0xff] %vm419, %v467
      %p476 = scmp.lt.s32.totalorder %s19, 1
      %s477 = scalar_select %p476, %s19, 1
      %s478 = smul.addr %s477, 8
      %s479 = smul.addr %s478, 8
      %s480 = scalar_lea.vmem %s2, %s479
      %p481 = scmp.lt.s32.totalorder %s19, 1
      %s482 = scalar_select %p481, %s19, 1
      %s483 = smul.addr %s482, 8
      %s484 = smul.addr %s483, 8
      %s485 = scalar_lea.vmem %s3, %s484
      // Predicated region
      $region33: #{tpu_custom_call.1} parent=27 // pred_check
        %p486 = pneg %p94
      $region34: #{tpu_custom_call.1} parent=27 // pred_check_branch
        %488 = sbr.rel (%p486) target = $region36
      $region35: #{tpu_custom_call.1} parent=27 // pred_region
        _
      $region36: #{tpu_custom_call.1} parent=27 // pred_fallthru
        _
      // Predicated region
      $region37: #{tpu_custom_call.1} parent=27 // pred_check
        %p489 = pneg %p120
      $region38: #{tpu_custom_call.1} parent=27 // pred_check_branch
        %491 = sbr.rel (%p489) target = $region40
      $region39: #{tpu_custom_call.1} parent=27 // pred_region
        _
      $region40: #{tpu_custom_call.1} parent=27 // pred_fallthru
        _
    $region28: #{tpu_custom_call.1} parent=5 // pred_fallthru
      _
    %p492 = scmp.le.s32.totalorder 2, %s10
    // Predicated region
    $region41: #{tpu_custom_call.1} parent=5 // pred_check
      %p493 = pneg %p492
    $region42: #{tpu_custom_call.1} parent=5 // pred_check_branch
      %495 = sbr.rel (%p493) target = $region44
    $region43: #{tpu_custom_call.1} parent=5 // pred_region
      %s496 = ssub.s32 %s10, 2
      // Predicated region
      $region45: #{tpu_custom_call.1} parent=43 // pred_check
        %p497 = pneg %p100
      $region46: #{tpu_custom_call.1} parent=43 // pred_check_branch
        %499 = sbr.rel (%p497) target = $region48
      $region47: #{tpu_custom_call.1} parent=43 // pred_region
        %p500 = scmp.lt.s32.totalorder %s21, 1
        %s501 = scalar_select %p500, %s21, 1
        %s502 = smul.addr %s501, 8
        %s503 = smul.addr %s502, 8
        %s504 = scalar_lea.vmem %s2, %s503
      $region48: #{tpu_custom_call.1} parent=43 // pred_fallthru
        _
      // Predicated region
      $region49: #{tpu_custom_call.1} parent=43 // pred_check
        %p505 = pneg %p126
      $region50: #{tpu_custom_call.1} parent=43 // pred_check_branch
        %507 = sbr.rel (%p505) target = $region52
      $region51: #{tpu_custom_call.1} parent=43 // pred_region
        %p508 = scmp.lt.s32.totalorder %s21, 1
        %s509 = scalar_select %p508, %s21, 1
        %s510 = smul.addr %s509, 8
        %s511 = smul.addr %s510, 8
        %s512 = scalar_lea.vmem %s3, %s511
      $region52: #{tpu_custom_call.1} parent=43 // pred_fallthru
        _
    $region44: #{tpu_custom_call.1} parent=5 // pred_fallthru
      _
  $region6: #{tpu_custom_call.1} parent=0 // loop_footer
    %s14 = sadd.s32 1, %s10
  $region7: #{tpu_custom_call.1} parent=0 // loop_footer_branch
    %9 = sbr.rel target = $region3
  $region8: #{tpu_custom_call.1} parent=0 // loop_exit
    _

</llo_original>
